<compile_context>
chip_gen: v5e
topology: v5e:2x2
jax: 0.10.0
libtpu: 0.0.40
codegen_flags: <defaults>
</compile_context>

<pallas_src>
import functools

import jax
import jax.numpy as jnp
from jax.experimental import pallas as pl
from jax.experimental.pallas import tpu as pltpu


def _round_up(n, m):
    return ((n + m - 1) // m) * m


def _choose_tile_b(B, tile_b):
    """Batch tile: multiple of 8 (sublane rule), capped by tile_b, split into >=2
    grid steps for larger batches so v7x megacore can use both TensorCores."""
    B8 = _round_up(B, 8)
    tb = min(_round_up(tile_b, 8), B8)
    if B8 > 256:
        tb = min(tb, _round_up(pl.cdiv(B8, 2), 256))
    return max(tb, 8)


def classifier_fc_large_kernel(x_ref, w1_ref, b1_ref, w2_ref, b2_ref, o_ref,
                               *, compute_dtype):
    # linear_1: [TB, D] @ [D, 64] on the MXU, f32 accumulation; bias + ReLU on the VPU.
    x = x_ref[...].astype(compute_dtype)           # in-kernel cast (no extra HBM pass)
    h = jnp.dot(x, w1_ref[...], preferred_element_type=jnp.float32)
    h = jnp.maximum(h + b1_ref[...], 0.0)
    # linear_2: [TB, 64] @ [64, 10] (K=64 -> half the MXU passes vs a padded K=128).
    out = jnp.dot(h.astype(compute_dtype), w2_ref[...],
                  preferred_element_type=jnp.float32)
    o_ref[...] = (out + b2_ref[...]).astype(o_ref.dtype)


def prepare_params(w1_t, b1, w2_t, b2, compute_dtype=jnp.bfloat16):
    """One-time parameter prep (hoisted out of the per-call path): cast weights to the
    MXU compute dtype, keep biases f32, reshape biases to (1, N)."""
    hidden = w1_t.shape[1]
    n_classes = w2_t.shape[1]
    return (w1_t.astype(compute_dtype),
            jnp.reshape(b1, (1, hidden)).astype(jnp.float32),
            w2_t.astype(compute_dtype),
            jnp.reshape(b2, (1, n_classes)).astype(jnp.float32))


def classifier_fc_large(x, w1, b1, w2, b2, *, tile_b=2048,
                        compute_dtype=jnp.bfloat16):
    """Forward pass of ClassifierFCLarge.

    x:  [B, latent_dim] f32
    w1: [latent_dim, 64] (pre-transposed), b1: [64] or [1, 64]
    w2: [64, 10]         (pre-transposed), b2: [10] or [1, 10]
    Returns [B, 10] f32.
    """
    B, D = x.shape
    hidden = w1.shape[1]
    n_classes = w2.shape[1]

    # No-ops if prepare_params() was already applied (and elided under jit).
    w1c, b1r, w2c, b2r = prepare_params(w1, b1, w2, b2, compute_dtype)

    TB = _choose_tile_b(B, tile_b)
    grid = (pl.cdiv(B, TB),)

    flops = 2 * B * D * hidden + 2 * B * hidden * n_classes
    bytes_accessed = (x.size * x.dtype.itemsize
                      + w1c.size * w1c.dtype.itemsize
                      + b1r.size * b1r.dtype.itemsize
                      + w2c.size * w2c.dtype.itemsize
                      + b2r.size * b2r.dtype.itemsize
                      + B * n_classes * 4)
    cost = pl.CostEstimate(flops=flops, transcendentals=0,
                           bytes_accessed=bytes_accessed)

    kernel = functools.partial(classifier_fc_large_kernel,
                               compute_dtype=compute_dtype)

    return pl.pallas_call(
        kernel,
        out_shape=jax.ShapeDtypeStruct((B, n_classes), jnp.float32),
        grid=grid,
        in_specs=[
            pl.BlockSpec((TB, D), lambda i: (i, 0)),          # x: streamed batch tiles
            pl.BlockSpec((D, hidden), lambda i: (0, 0)),      # w1: VMEM-resident
            pl.BlockSpec((1, hidden), lambda i: (0, 0)),      # b1: VMEM-resident
            pl.BlockSpec((hidden, n_classes), lambda i: (0, 0)),  # w2: VMEM-resident
            pl.BlockSpec((1, n_classes), lambda i: (0, 0)),   # b2: VMEM-resident
        ],
        # Narrow (TB, 10) output block: last dim equals the full array dim, so it is
        # legal despite being <128 lanes; store volume is tiny vs the DMA bytes saved.
        out_specs=pl.BlockSpec((TB, n_classes), lambda i: (i, 0)),
        compiler_params=pltpu.CompilerParams(
            dimension_semantics=("parallel",)),
        cost_estimate=cost,
    )(x, w1c, b1r, w2c, b2r)


def init_params(key, latent_dim=512, hidden=64, n_classes=10, dtype=jnp.float32):
    """Deterministic init mimicking PyTorch nn.Linear default (U(-k, k), k=1/sqrt(fan_in))."""
    k1, k2, k3, k4 = jax.random.split(key, 4)
    bound1 = 1.0 / (latent_dim ** 0.5)
    bound2 = 1.0 / (hidden ** 0.5)
    # Stored already transposed: [in, out]
    w1_t = jax.random.uniform(k1, (latent_dim, hidden), dtype, -bound1, bound1)
    b1 = jax.random.uniform(k2, (hidden,), dtype, -bound1, bound1)
    w2_t = jax.random.uniform(k3, (hidden, n_classes), dtype, -bound2, bound2)
    b2 = jax.random.uniform(k4, (n_classes,), dtype, -bound2, bound2)
    return w1_t, b1, w2_t, b2


def _reference(x, w1_t, b1, w2_t, b2):
    return jnp.maximum(x @ w1_t + b1[None, :], 0.0) @ w2_t + b2[None, :]


if __name__ == "__main__":
    key = jax.random.PRNGKey(0)
    kx1, kx2, kp = jax.random.split(key, 3)

    LATENT = 512
    w1_t, b1, w2_t, b2 = init_params(kp, latent_dim=LATENT)

    fwd = jax.jit(functools.partial(classifier_fc_large, tile_b=2048))

    # Case 1: small batch (single tile).
    B1 = 16
    x1 = jax.random.normal(kx1, (B1, LATENT), dtype=jnp.float32)
    out1 = jax.block_until_ready(fwd(x1, w1_t, b1, w2_t, b2))
    ref1 = _reference(x1, w1_t, b1, w2_t, b2)
    assert out1.shape == (B1, 10)
    # bf16 MXU inputs with f32 accumulation -> loosened tolerance vs the f32 reference.
    assert jnp.allclose(out1, ref1, atol=2e-2, rtol=2e-2)

    # Case 2: ragged batch exercising the cdiv grid (multi-step, masked last tile).
    B2 = 300
    x2 = jax.random.normal(kx2, (B2, LATENT), dtype=jnp.float32)
    out2 = jax.block_until_ready(
        classifier_fc_large(x2, w1_t, b1, w2_t, b2, tile_b=128))
    ref2 = _reference(x2, w1_t, b1, w2_t, b2)
    assert out2.shape == (B2, 10)
    assert jnp.allclose(out2, ref2, atol=2e-2, rtol=2e-2)

    print("KERNEL_OK")
</pallas_src>

<mosaic_0001>
module attributes {stable_mosaic.version = 11 : i64} {
  func.func @classifier_fc_large_kernel(%arg0: i32, %arg1: memref<16x512xf32, #tpu.memory_space<vmem>>, %arg2: memref<512x64xbf16, #tpu.memory_space<vmem>>, %arg3: memref<1x64xf32, #tpu.memory_space<vmem>>, %arg4: memref<64x10xbf16, #tpu.memory_space<vmem>>, %arg5: memref<1x10xf32, #tpu.memory_space<vmem>>, %arg6: memref<16x10xf32, #tpu.memory_space<vmem>>) attributes {dimension_semantics = [#tpu.dimension_semantics<parallel>], iteration_bounds = array<i64: 1>, scalar_prefetch = 0 : i64, scratch_operands = 0 : i64, tpu.core_type = #tpu.core_type<tc>, window_params = [{transform_indices = @transform_0, window_bounds = array<i64: 16, 512>}, {pipeline_mode = #tpu.pipeline_mode<synchronous>, transform_indices = @transform_1, window_bounds = array<i64: 512, 64>}, {pipeline_mode = #tpu.pipeline_mode<synchronous>, transform_indices = @transform_2, window_bounds = array<i64: 1, 64>}, {pipeline_mode = #tpu.pipeline_mode<synchronous>, transform_indices = @transform_3, window_bounds = array<i64: 64, 10>}, {pipeline_mode = #tpu.pipeline_mode<synchronous>, transform_indices = @transform_4, window_bounds = array<i64: 1, 10>}, {transform_indices = @transform_5, window_bounds = array<i64: 16, 10>}]} {
    %c0 = arith.constant 0 : index
    %c0_0 = arith.constant 0 : index
    %0 = vector.load %arg1[%c0, %c0_0] : memref<16x512xf32, #tpu.memory_space<vmem>>, vector<16x512xf32>
    %1 = arith.truncf %0 : vector<16x512xf32> to vector<16x512xbf16>
    %c0_1 = arith.constant 0 : index
    %c0_2 = arith.constant 0 : index
    %2 = vector.load %arg2[%c0_1, %c0_2] : memref<512x64xbf16, #tpu.memory_space<vmem>>, vector<512x64xbf16>
    %cst = arith.constant dense<0.000000e+00> : vector<16x64xf32>
    %3 = tpu.matmul %1, %2, %cst {dimension_numbers = #tpu.dot_dimension_numbers<[1], [0], [0], [1], [0, 0, 1, 1], [], []>} : vector<16x512xbf16>, vector<512x64xbf16>, vector<16x64xf32> -> vector<16x64xf32>
    %c0_3 = arith.constant 0 : index
    %c0_4 = arith.constant 0 : index
    %4 = vector.load %arg3[%c0_3, %c0_4] : memref<1x64xf32, #tpu.memory_space<vmem>>, vector<1x64xf32>
    %5 = vector.broadcast %4 : vector<1x64xf32> to vector<16x64xf32>
    %6 = arith.addf %3, %5 : vector<16x64xf32>
    %cst_5 = arith.constant 0.000000e+00 : f32
    %7 = vector.broadcast %cst_5 : f32 to vector<16x64xf32>
    %8 = arith.maximumf %6, %7 : vector<16x64xf32>
    %9 = arith.truncf %8 : vector<16x64xf32> to vector<16x64xbf16>
    %c0_6 = arith.constant 0 : index
    %c0_7 = arith.constant 0 : index
    %10 = vector.load %arg4[%c0_6, %c0_7] : memref<64x10xbf16, #tpu.memory_space<vmem>>, vector<64x10xbf16>
    %cst_8 = arith.constant dense<0.000000e+00> : vector<16x10xf32>
    %11 = tpu.matmul %9, %10, %cst_8 {dimension_numbers = #tpu.dot_dimension_numbers<[1], [0], [0], [1], [0, 0, 1, 1], [], []>} : vector<16x64xbf16>, vector<64x10xbf16>, vector<16x10xf32> -> vector<16x10xf32>
    %c0_9 = arith.constant 0 : index
    %c0_10 = arith.constant 0 : index
    %12 = vector.load %arg5[%c0_9, %c0_10] : memref<1x10xf32, #tpu.memory_space<vmem>>, vector<1x10xf32>
    %13 = vector.broadcast %12 : vector<1x10xf32> to vector<16x10xf32>
    %14 = arith.addf %11, %13 : vector<16x10xf32>
    %c0_11 = arith.constant 0 : index
    %c0_12 = arith.constant 0 : index
    %15 = vector.load %arg6[%c0_11, %c0_12] : memref<16x10xf32, #tpu.memory_space<vmem>>, vector<16x10xf32>
    tpu.vector_store %arg6[%c0_11, %c0_12], %14 {strides = array<i32>} : memref<16x10xf32, #tpu.memory_space<vmem>>, vector<16x10xf32>,
    return
  }
  func.func @transform_0(%arg0: i32) -> (i32, i32) {
    %c0_i32 = arith.constant 0 : i32
    %c0_i32_0 = arith.constant 0 : i32
    return %arg0, %c0_i32 : i32, i32
  }
  func.func @transform_1(%arg0: i32) -> (i32, i32) {
    %c0_i32 = arith.constant 0 : i32
    %c0_i32_0 = arith.constant 0 : i32
    %c0_i32_1 = arith.constant 0 : i32
    return %c0_i32, %c0_i32_0 : i32, i32
  }
  func.func @transform_2(%arg0: i32) -> (i32, i32) {
    %c0_i32 = arith.constant 0 : i32
    %c0_i32_0 = arith.constant 0 : i32
    %c0_i32_1 = arith.constant 0 : i32
    return %c0_i32, %c0_i32_0 : i32, i32
  }
  func.func @transform_3(%arg0: i32) -> (i32, i32) {
    %c0_i32 = arith.constant 0 : i32
    %c0_i32_0 = arith.constant 0 : i32
    %c0_i32_1 = arith.constant 0 : i32
    return %c0_i32, %c0_i32_0 : i32, i32
  }
  func.func @transform_4(%arg0: i32) -> (i32, i32) {
    %c0_i32 = arith.constant 0 : i32
    %c0_i32_0 = arith.constant 0 : i32
    %c0_i32_1 = arith.constant 0 : i32
    return %c0_i32, %c0_i32_0 : i32, i32
  }
  func.func @transform_5(%arg0: i32) -> (i32, i32) {
    %c0_i32 = arith.constant 0 : i32
    %c0_i32_0 = arith.constant 0 : i32
    return %arg0, %c0_i32 : i32, i32
  }
}

</mosaic_0001>

<llo_original>
// kernel: classifier_fc_large.1
$region0: #{classifier_fc_large.1}
  #allocation0 [shape = 'u32[]', space=smem, size = 0x4, offset = 0x4, fixed_abs, tag = 'smem constant byte address 0x4 - core index']
  #allocation1 [shape = 'u32[72,128]{1,0:T(1,128)}', space=vmem, size = 0x9000, scoped, tag = 'internal scratch']
  %s0 = inlined_call_operand.vmem [shape: f32[16,512], index: 0, kind: input, shape index: {}]
  %s1 = inlined_call_operand.vmem [shape: bf16[512,64], index: 1, kind: input, shape index: {}]
  %s2 = inlined_call_operand.vmem [shape: f32[1,64], index: 2, kind: input, shape index: {}]
  %s3 = inlined_call_operand.vmem [shape: bf16[64,10], index: 3, kind: input, shape index: {}]
  %s4 = inlined_call_operand.vmem [shape: f32[1,10], index: 4, kind: input, shape index: {}]
  %s5 = inlined_call_operand.hbm [shape: f32[16,10], index: 5, kind: output, shape index: {}]
  %s6 = sld [smem:[#allocation0]]
  $region30: #{classifier_fc_large.1} parent=0
    _
  %s8 = ssub.s32 1, %s6
  %s9 = scalar_select 0, %s8, %s6
  $region1: #{classifier_fc_large.1} parent=0
    #allocation2 [shape = 'u8[8192]{0}', space=vmem, size = 0x2000, scoped, tag = 'output window, operand 0, single buffered']
    #allocation3 [shape = 's32[1]{0}', space=sflag, size = 0x4, scoped, tag = 'scoped memory for classifier_fc_large.1']
    %10 = vsyncpa [#allocation3], 0
    // Predicated region
    $region2: #{classifier_fc_large.1} parent=1 // pred_check
      _
    $region3: #{classifier_fc_large.1} parent=1 // pred_check_branch
      %12 = sbr.rel (0) target = $region5
    $region4: #{classifier_fc_large.1} parent=1 // pred_region
      _
    $region5: #{classifier_fc_large.1} parent=1 // pred_fallthru
      _
    // Predicated region
    $region6: #{classifier_fc_large.1} parent=1 // pred_check
      _
    $region7: #{classifier_fc_large.1} parent=1 // pred_check_branch
      %14 = sbr.rel (0) target = $region9
    $region8: #{classifier_fc_large.1} parent=1 // pred_region
      _
    $region9: #{classifier_fc_large.1} parent=1 // pred_fallthru
      _
    // Predicated region
    $region10: #{classifier_fc_large.1} parent=1 // pred_check
      _
    $region11: #{classifier_fc_large.1} parent=1 // pred_check_branch
      %16 = sbr.rel (0) target = $region13
    $region12: #{classifier_fc_large.1} parent=1 // pred_region
      _
    $region13: #{classifier_fc_large.1} parent=1 // pred_fallthru
      _
    // Predicated region
    $region14: #{classifier_fc_large.1} parent=1 // pred_check
      _
    $region15: #{classifier_fc_large.1} parent=1 // pred_check_branch
      %18 = sbr.rel (0) target = $region17
    $region16: #{classifier_fc_large.1} parent=1 // pred_region
      _
    $region17: #{classifier_fc_large.1} parent=1 // pred_fallthru
      _
    // Predicated region
    $region18: #{classifier_fc_large.1} parent=1 // pred_check
      _
    $region19: #{classifier_fc_large.1} parent=1 // pred_check_branch
      %20 = sbr.rel (0) target = $region21
    $region20: #{classifier_fc_large.1} parent=1 // pred_region
      _
    $region21: #{classifier_fc_large.1} parent=1 // pred_fallthru
      _
    %v22 = vld [vmem:[%s0] sm:$0xff]
    %v23 = vld [vmem:[%s0 + $0x8] sm:$0xff]
    %v24 = vld [vmem:[%s0 + $0x10] sm:$0xff]
    %v25 = vld [vmem:[%s0 + $0x18] sm:$0xff]
    %v26 = vld [vmem:[%s0 + $0x20] sm:$0xff]
    %v27 = vld [vmem:[%s0 + $0x28] sm:$0xff]
    %v28 = vld [vmem:[%s0 + $0x30] sm:$0xff]
    %v29 = vld [vmem:[%s0 + $0x38] sm:$0xff]
    %v30 = vpack.c.bf16 %v26, %v22
    %v31 = vpack.c.bf16 %v27, %v23
    %v32 = vpack.c.bf16 %v28, %v24
    %v33 = vpack.c.bf16 %v29, %v25
    %v34 = vld [vmem:[%s1] sm:$0xf]
    %v35 = vld [vmem:[%s1 + $0x4] sm:$0xf]
    %v36 = vld [vmem:[%s1 + $0x8] sm:$0xf]
    %v37 = vld [vmem:[%s1 + $0xc] sm:$0xf]
    %v38 = vld [vmem:[%s1 + $0x10] sm:$0xf]
    %v39 = vld [vmem:[%s1 + $0x14] sm:$0xf]
    %v40 = vld [vmem:[%s1 + $0x18] sm:$0xf]
    %v41 = vld [vmem:[%s1 + $0x1c] sm:$0xf]
    %v42 = vld [vmem:[%s1 + $0x20] sm:$0xf]
    %v43 = vld [vmem:[%s1 + $0x24] sm:$0xf]
    %v44 = vld [vmem:[%s1 + $0x28] sm:$0xf]
    %v45 = vld [vmem:[%s1 + $0x2c] sm:$0xf]
    %v46 = vld [vmem:[%s1 + $0x30] sm:$0xf]
    %v47 = vld [vmem:[%s1 + $0x34] sm:$0xf]
    %v48 = vld [vmem:[%s1 + $0x38] sm:$0xf]
    %v49 = vld [vmem:[%s1 + $0x3c] sm:$0xf]
    %v50 = vld [vmem:[%s1 + $0x40] sm:$0xf]
    %v51 = vld [vmem:[%s1 + $0x44] sm:$0xf]
    %v52 = vld [vmem:[%s1 + $0x48] sm:$0xf]
    %v53 = vld [vmem:[%s1 + $0x4c] sm:$0xf]
    %v54 = vld [vmem:[%s1 + $0x50] sm:$0xf]
    %v55 = vld [vmem:[%s1 + $0x54] sm:$0xf]
    %v56 = vld [vmem:[%s1 + $0x58] sm:$0xf]
    %v57 = vld [vmem:[%s1 + $0x5c] sm:$0xf]
    %v58 = vld [vmem:[%s1 + $0x60] sm:$0xf]
    %v59 = vld [vmem:[%s1 + $0x64] sm:$0xf]
    %v60 = vld [vmem:[%s1 + $0x68] sm:$0xf]
    %v61 = vld [vmem:[%s1 + $0x6c] sm:$0xf]
    %v62 = vld [vmem:[%s1 + $0x70] sm:$0xf]
    %v63 = vld [vmem:[%s1 + $0x74] sm:$0xf]
    %v64 = vld [vmem:[%s1 + $0x78] sm:$0xf]
    %v65 = vld [vmem:[%s1 + $0x7c] sm:$0xf]
    %v66 = vld [vmem:[%s1 + $0x80] sm:$0xf]
    %v67 = vld [vmem:[%s1 + $0x84] sm:$0xf]
    %v68 = vld [vmem:[%s1 + $0x88] sm:$0xf]
    %v69 = vld [vmem:[%s1 + $0x8c] sm:$0xf]
    %v70 = vld [vmem:[%s1 + $0x90] sm:$0xf]
    %v71 = vld [vmem:[%s1 + $0x94] sm:$0xf]
    %v72 = vld [vmem:[%s1 + $0x98] sm:$0xf]
    %v73 = vld [vmem:[%s1 + $0x9c] sm:$0xf]
    %v74 = vld [vmem:[%s1 + $0xa0] sm:$0xf]
    %v75 = vld [vmem:[%s1 + $0xa4] sm:$0xf]
    %v76 = vld [vmem:[%s1 + $0xa8] sm:$0xf]
    %v77 = vld [vmem:[%s1 + $0xac] sm:$0xf]
    %v78 = vld [vmem:[%s1 + $0xb0] sm:$0xf]
    %v79 = vld [vmem:[%s1 + $0xb4] sm:$0xf]
    %v80 = vld [vmem:[%s1 + $0xb8] sm:$0xf]
    %v81 = vld [vmem:[%s1 + $0xbc] sm:$0xf]
    %v82 = vld [vmem:[%s1 + $0xc0] sm:$0xf]
    %v83 = vld [vmem:[%s1 + $0xc4] sm:$0xf]
    %v84 = vld [vmem:[%s1 + $0xc8] sm:$0xf]
    %v85 = vld [vmem:[%s1 + $0xcc] sm:$0xf]
    %v86 = vld [vmem:[%s1 + $0xd0] sm:$0xf]
    %v87 = vld [vmem:[%s1 + $0xd4] sm:$0xf]
    %v88 = vld [vmem:[%s1 + $0xd8] sm:$0xf]
    %v89 = vld [vmem:[%s1 + $0xdc] sm:$0xf]
    %v90 = vld [vmem:[%s1 + $0xe0] sm:$0xf]
    %v91 = vld [vmem:[%s1 + $0xe4] sm:$0xf]
    %v92 = vld [vmem:[%s1 + $0xe8] sm:$0xf]
    %v93 = vld [vmem:[%s1 + $0xec] sm:$0xf]
    %v94 = vld [vmem:[%s1 + $0xf0] sm:$0xf]
    %v95 = vld [vmem:[%s1 + $0xf4] sm:$0xf]
    %v96 = vld [vmem:[%s1 + $0xf8] sm:$0xf]
    %v97 = vld [vmem:[%s1 + $0xfc] sm:$0xf]
    %v98 = vld [vmem:[%s2] sm:$0x1]
    %v100 = vperm.slane %v98, 0
    %v166 = vunpack.c.l.b16 %v34
    %v167 = vunpack.c.l.b16 %v35
    %v168 = vunpack.c.l.b16 %v36
    %v169 = vunpack.c.l.b16 %v37
    %v170 = vunpack.c.l.b16 %v38
    %v171 = vunpack.c.l.b16 %v39
    %v172 = vunpack.c.l.b16 %v40
    %v173 = vunpack.c.l.b16 %v41
    %v174 = vunpack.c.l.b16 %v42
    %v175 = vunpack.c.l.b16 %v43
    %v176 = vunpack.c.l.b16 %v44
    %v177 = vunpack.c.l.b16 %v45
    %v178 = vunpack.c.l.b16 %v46
    %v179 = vunpack.c.l.b16 %v47
    %v180 = vunpack.c.l.b16 %v48
    %v181 = vunpack.c.l.b16 %v49
    %v182 = vunpack.c.l.b16 %v50
    %v183 = vunpack.c.l.b16 %v51
    %v184 = vunpack.c.l.b16 %v52
    %v185 = vunpack.c.l.b16 %v53
    %v186 = vunpack.c.l.b16 %v54
    %v187 = vunpack.c.l.b16 %v55
    %v188 = vunpack.c.l.b16 %v56
    %v189 = vunpack.c.l.b16 %v57
    %v190 = vunpack.c.l.b16 %v58
    %v191 = vunpack.c.l.b16 %v59
    %v192 = vunpack.c.l.b16 %v60
    %v193 = vunpack.c.l.b16 %v61
    %v194 = vunpack.c.l.b16 %v62
    %v195 = vunpack.c.l.b16 %v63
    %v196 = vunpack.c.l.b16 %v64
    %v197 = vunpack.c.l.b16 %v65
    %v198 = vunpack.c.l.b16 %v66
    %v199 = vunpack.c.l.b16 %v67
    %v200 = vunpack.c.l.b16 %v68
    %v201 = vunpack.c.l.b16 %v69
    %v202 = vunpack.c.l.b16 %v70
    %v203 = vunpack.c.l.b16 %v71
    %v204 = vunpack.c.l.b16 %v72
    %v205 = vunpack.c.l.b16 %v73
    %v206 = vunpack.c.l.b16 %v74
    %v207 = vunpack.c.l.b16 %v75
    %v208 = vunpack.c.l.b16 %v76
    %v209 = vunpack.c.l.b16 %v77
    %v210 = vunpack.c.l.b16 %v78
    %v211 = vunpack.c.l.b16 %v79
    %v212 = vunpack.c.l.b16 %v80
    %v213 = vunpack.c.l.b16 %v81
    %v214 = vunpack.c.l.b16 %v82
    %v215 = vunpack.c.l.b16 %v83
    %v216 = vunpack.c.l.b16 %v84
    %v217 = vunpack.c.l.b16 %v85
    %v218 = vunpack.c.l.b16 %v86
    %v219 = vunpack.c.l.b16 %v87
    %v220 = vunpack.c.l.b16 %v88
    %v221 = vunpack.c.l.b16 %v89
    %v222 = vunpack.c.l.b16 %v90
    %v223 = vunpack.c.l.b16 %v91
    %v224 = vunpack.c.l.b16 %v92
    %v225 = vunpack.c.l.b16 %v93
    %v226 = vunpack.c.l.b16 %v94
    %v227 = vunpack.c.l.b16 %v95
    %v228 = vunpack.c.l.b16 %v96
    %v229 = vunpack.c.l.b16 %v97
    %v230 = vpack.c.b16 %v167, %v166
    %v231 = vpack.c.b16 %v169, %v168
    %v232 = vpack.c.b16 %v171, %v170
    %v233 = vpack.c.b16 %v173, %v172
    %v234 = vpack.c.b16 %v175, %v174
    %v235 = vpack.c.b16 %v177, %v176
    %v236 = vpack.c.b16 %v179, %v178
    %v237 = vpack.c.b16 %v181, %v180
    %v238 = vpack.c.b16 %v183, %v182
    %v239 = vpack.c.b16 %v185, %v184
    %v240 = vpack.c.b16 %v187, %v186
    %v241 = vpack.c.b16 %v189, %v188
    %v242 = vpack.c.b16 %v191, %v190
    %v243 = vpack.c.b16 %v193, %v192
    %v244 = vpack.c.b16 %v195, %v194
    %v245 = vpack.c.b16 %v197, %v196
    %v246 = vpack.c.b16 %v199, %v198
    %v247 = vpack.c.b16 %v201, %v200
    %v248 = vpack.c.b16 %v203, %v202
    %v249 = vpack.c.b16 %v205, %v204
    %v250 = vpack.c.b16 %v207, %v206
    %v251 = vpack.c.b16 %v209, %v208
    %v252 = vpack.c.b16 %v211, %v210
    %v253 = vpack.c.b16 %v213, %v212
    %v254 = vpack.c.b16 %v215, %v214
    %v255 = vpack.c.b16 %v217, %v216
    %v256 = vpack.c.b16 %v219, %v218
    %v257 = vpack.c.b16 %v221, %v220
    %v258 = vpack.c.b16 %v223, %v222
    %v259 = vpack.c.b16 %v225, %v224
    %v260 = vpack.c.b16 %v227, %v226
    %v261 = vpack.c.b16 %v229, %v228
    %294 = vmatpush.bf16.msra.mxu0 %v237
    %295 = vmatpush.bf16.msra.mxu0 %v236
    %296 = vmatpush.bf16.msra.mxu0 %v235
    %297 = vmatpush.bf16.msra.mxu0 %v234
    %298 = vmatpush.bf16.msra.mxu0 %v233
    %299 = vmatpush.bf16.msra.mxu0 %v232
    %300 = vmatpush.bf16.msra.mxu0 %v231
    %301 = vmatpush.bf16.msra.mxu0 %v230
    %302 = vmatmul.bf16.gmra.mxu0 %v30
    %v303 = vpop.f32.mrf.mxu0
    %v304 = vadd.f32 %v100, %v303
    %v305 = vpop.f32.mrf.mxu0
    %v306 = vadd.f32 %v100, %v305
    %307 = vdwg.mxu0
    %308 = vmatpush.bf16.msra.mxu0 %v245
    %309 = vmatpush.bf16.msra.mxu0 %v244
    %310 = vmatpush.bf16.msra.mxu0 %v243
    %311 = vmatpush.bf16.msra.mxu0 %v242
    %312 = vmatpush.bf16.msra.mxu0 %v241
    %313 = vmatpush.bf16.msra.mxu0 %v240
    %314 = vmatpush.bf16.msra.mxu0 %v239
    %315 = vmatpush.bf16.msra.mxu0 %v238
    %316 = vmatmul.bf16.gmra.mxu0 %v31
    %v317 = vpop.f32.mrf.mxu0
    %v318 = vadd.f32 %v304, %v317
    %v319 = vpop.f32.mrf.mxu0
    %v320 = vadd.f32 %v306, %v319
    %321 = vdwg.mxu0
    %322 = vmatpush.bf16.msra.mxu0 %v253
    %323 = vmatpush.bf16.msra.mxu0 %v252
    %324 = vmatpush.bf16.msra.mxu0 %v251
    %325 = vmatpush.bf16.msra.mxu0 %v250
    %326 = vmatpush.bf16.msra.mxu0 %v249
    %327 = vmatpush.bf16.msra.mxu0 %v248
    %328 = vmatpush.bf16.msra.mxu0 %v247
    %329 = vmatpush.bf16.msra.mxu0 %v246
    %330 = vmatmul.bf16.gmra.mxu0 %v32
    %v331 = vpop.f32.mrf.mxu0
    %v332 = vadd.f32 %v318, %v331
    %v333 = vpop.f32.mrf.mxu0
    %v334 = vadd.f32 %v320, %v333
    %335 = vdwg.mxu0
    %336 = vmatpush.bf16.msra.mxu0 %v261
    %337 = vmatpush.bf16.msra.mxu0 %v260
    %338 = vmatpush.bf16.msra.mxu0 %v259
    %339 = vmatpush.bf16.msra.mxu0 %v258
    %340 = vmatpush.bf16.msra.mxu0 %v257
    %341 = vmatpush.bf16.msra.mxu0 %v256
    %342 = vmatpush.bf16.msra.mxu0 %v255
    %343 = vmatpush.bf16.msra.mxu0 %v254
    %344 = vmatmul.bf16.gmra.mxu0 %v33
    %v345 = vpop.f32.mrf.mxu0
    %v346 = vadd.f32 %v332, %v345
    %v347 = vpop.f32.mrf.mxu0
    %v348 = vadd.f32 %v334, %v347
    %349 = vdwg.mxu0
    %v350 = vmax.f32 %v346, 0.0
    %v351 = vmax.f32 %v348, 0.0
    %v352 = vpack.c.bf16 %v351, %v350
    %v353 = vld [vmem:[%s3] sm:$0xf]
    %v354 = vld [vmem:[%s3 + $0x4] sm:$0xf]
    %v355 = vld [vmem:[%s3 + $0x8] sm:$0xf]
    %v356 = vld [vmem:[%s3 + $0xc] sm:$0xf]
    %v357 = vld [vmem:[%s3 + $0x10] sm:$0xf]
    %v358 = vld [vmem:[%s3 + $0x14] sm:$0xf]
    %v359 = vld [vmem:[%s3 + $0x18] sm:$0xf]
    %v360 = vld [vmem:[%s3 + $0x1c] sm:$0xf]
    %v361 = vld [vmem:[%s4] sm:$0x1]
    %v363 = vperm.slane %v361, 0
    %v373 = vunpack.c.l.b16 %v353
    %v374 = vunpack.c.l.b16 %v354
    %v375 = vunpack.c.l.b16 %v355
    %v376 = vunpack.c.l.b16 %v356
    %v377 = vunpack.c.l.b16 %v357
    %v378 = vunpack.c.l.b16 %v358
    %v379 = vunpack.c.l.b16 %v359
    %v380 = vunpack.c.l.b16 %v360
    %v381 = vpack.c.b16 %v374, %v373
    %v382 = vpack.c.b16 %v376, %v375
    %v383 = vpack.c.b16 %v378, %v377
    %v384 = vpack.c.b16 %v380, %v379
    %vm389 = vcmask 523264
    %v391 = vsel %vm389, %v352, 0
    %393 = vmatpush.bf16.msra.mxu0 0
    %394 = vmatpush.bf16.msra.mxu0 0
    %395 = vmatpush.bf16.msra.mxu0 0
    %396 = vmatpush.bf16.msra.mxu0 0
    %397 = vmatpush.bf16.msra.mxu0 %v384
    %398 = vmatpush.bf16.msra.mxu0 %v383
    %399 = vmatpush.bf16.msra.mxu0 %v382
    %400 = vmatpush.bf16.msra.mxu0 %v381
    %401 = vmatmul.bf16.gmra.mxu0 %v391
    %v402 = vpop.f32.mrf.mxu0
    %v403 = vadd.f32 %v363, %v402
    %v404 = vpop.f32.mrf.mxu0
    %v405 = vadd.f32 %v363, %v404
    %406 = vdwg.mxu0
    %vm407 = vcmask 80896
    %408 = vst.msk [vmem:[#allocation2] sm:$0xff] %vm407, %v403
    %409 = vst.msk [vmem:[#allocation2 + $0x8] sm:$0xff] %vm407, %v405
    // Predicated region
    $region22: #{classifier_fc_large.1} parent=1 // pred_check
      _
    $region23: #{classifier_fc_large.1} parent=1 // pred_check_branch
      %411 = sbr.rel (0) target = $region25
    $region24: #{classifier_fc_large.1} parent=1 // pred_region
      %413 = vsyncadd [#allocation3], 0
      %s414 = sshll.u32 [#allocation2], 4
      %s415 = int_to_ptr.vmem [resolvable:$true] %s414
      %s416 = sshll.u32 %s5, 4
      %s417 = int_to_ptr.hbm [resolvable:$true] %s416
      %422 = dma.vmem_to_hbm [thread:$0]  %s415, 256, %s417, [#allocation3], 128, 128, 8
    $region25: #{classifier_fc_large.1} parent=1 // pred_fallthru
      _
    // Predicated region
    $region26: #{classifier_fc_large.1} parent=1 // pred_check
      _
    $region27: #{classifier_fc_large.1} parent=1 // pred_check_branch
      %424 = sbr.rel (0) target = $region29
    $region28: #{classifier_fc_large.1} parent=1 // pred_region
      %426 = dma.done [#allocation3], 256
    $region29: #{classifier_fc_large.1} parent=1 // pred_fallthru
      _
    %427 = vsyncpa [#allocation3], 1

</llo_original>
